<compile_context>
chip_gen: v7x
topology: tpu7x:2x2x1
jax: 0.10.0
libtpu: 0.0.40
codegen_flags: <defaults>
</compile_context>

<pallas_src>
import functools
import math

import jax
import jax.numpy as jnp
from jax.experimental import pallas as pl
from jax.experimental.pallas import tpu as pltpu


def _compute_dtype():
    # bf16 MXU operands on TPU; f32 elsewhere (the CPU / interpret executor
    # does not implement a BF16 x BF16 -> F32 dot).
    return jnp.bfloat16 if jax.default_backend() == "tpu" else jnp.float32


def _tune_block_kernel(x_ref, w_ref, p_ref, o_ref, patch_ref, *, width):
    """One (batch, row-tile) step of conv3x3 + bias + GELU + LayerNorm.

    x_ref:    (1, 1, Cin, (TH+2)*W + 2)  channel-major, H-padded, spatially
              flattened row slab (one zero guard element on each end).
    w_ref:    (Cout, 9*Cin)              fused 3x3 conv weight, tap-major K.
    p_ref:    (Cout, 3) f32              [:,0]=bias [:,1]=gamma [:,2]=beta
    o_ref:    (1, Cout, TH*W) f32        channel-major (lane-dense) tokens.
    patch_ref:(9*Cin, TH*W)              VMEM im2col scratch (channel-major).
    """
    cin = x_ref.shape[2]
    hw = patch_ref.shape[1]                       # TH * W flattened tokens

    # Column index j of every flattened token (p = i*W + j -> j = p % W);
    # used to zero the taps that would otherwise read across the W boundary.
    col = jax.lax.broadcasted_iota(jnp.int32, (1, hw), 1) % width
    at_left = col == 0
    at_right = col == width - 1

    # --- im2col: 9 contiguous static lane slices of the flat slab. ----------
    # Tap (dy, dx) of output token p lives at slab[:, p + dy*W + dx].
    for dy in range(3):
        for dx in range(3):
            k = dy * 3 + dx
            off = dy * width + dx                 # static lane offset
            tap = x_ref[0, 0, :, off:off + hw]    # (Cin, TH*W)
            if dx == 0:                           # left neighbour of col 0
                tap = jnp.where(at_left, 0.0, tap)
            elif dx == 2:                         # right neighbour of col W-1
                tap = jnp.where(at_right, 0.0, tap)
            patch_ref[k * cin:(k + 1) * cin, :] = tap

    # --- 3x3 conv as ONE MXU matmul, result already channel-major. ----------
    acc = jnp.dot(w_ref[...], patch_ref[...],
                  preferred_element_type=jnp.float32)       # (Cout, TH*W) f32

    # --- epilogue: bias + exact(erf) GELU + LayerNorm over channels. --------
    y = acc + p_ref[:, 0:1]

    # erf via A&S 7.1.26 (|abs err| <= 1.5e-7), exact divide (review item).
    z = jnp.abs(y) * 0.7071067811865476
    t = 1.0 / (1.0 + 0.3275911 * z)
    poly = t * (0.254829592 + t * (-0.284496736 + t * (1.421413741
                + t * (-1.453152027 + t * 1.061405429))))
    erf = 1.0 - poly * jnp.exp(-z * z)
    erf = jnp.where(y >= 0.0, erf, -erf)
    y = 0.5 * y * (1.0 + erf)

    # LayerNorm over the channel (sublane) axis: biased variance, eps=1e-5.
    mean = jnp.mean(y, axis=0, keepdims=True)
    yc = y - mean
    var = jnp.mean(yc * yc, axis=0, keepdims=True)
    yn = yc * jax.lax.rsqrt(var + 1e-5)
    o_ref[0] = (yn * p_ref[:, 1:2] + p_ref[:, 2:3]).astype(o_ref.dtype)


def _step_vmem_bytes(cin, cout, th, w, act_bytes):
    """Per-grid-step VMEM footprint (double-buffered blocks + scratch)."""
    s = (th + 2) * w + 2
    slab = 2 * cin * s * act_bytes            # input slab block (2 buffers)
    wgt = 2 * 9 * cin * cout * act_bytes      # fused weight
    par = 2 * cout * 3 * 4                    # bias/gamma/beta
    outb = 2 * cout * th * w * 4              # output block
    patch = 9 * cin * th * w * act_bytes      # im2col scratch (single)
    return slab + wgt + par + outb + patch


def _choose_row_tile(h, w, cin, cout, act_bytes, max_tokens=4096,
                     max_step_bytes=40 * 1024 * 1024):
    """Largest TH dividing H with TH*W a multiple of 128, TH*W <= max_tokens
    and per-step VMEM footprint <= max_step_bytes (v7x 64 MiB VMEM safe)."""
    best = None
    for th in range(1, h + 1):
        if h % th or (th * w) % 128 or th * w > max_tokens:
            continue
        if _step_vmem_bytes(cin, cout, th, w, act_bytes) > max_step_bytes:
            continue
        best = th
    # Fallback: single row tile.  Still correct, but the output minor dim is
    # then H*W which may not be lane-aligned (masked stores) -- explicit.
    return best if best is not None else h


def tune_block_final(x, conv_w, conv_b, gamma, beta, resolution,
                     row_tile=None, compute_dtype=None):
    """x:(B, H*W, Cin) f32 -> (B, Cout, H, W) f32 (PyTorch NCHW output)."""
    B, HW, Cin = x.shape
    H, W = resolution
    assert HW == H * W, (HW, H, W)
    Cout = conv_w.shape[0]

    if compute_dtype is None:
        compute_dtype = _compute_dtype()
    act_bytes = jnp.dtype(compute_dtype).itemsize

    TH = (_choose_row_tile(H, W, Cin, Cout, act_bytes)
          if row_tile is None else row_tile)
    assert H % TH == 0, (H, TH)
    nrt = H // TH
    # Lane-dense output blocks need TH*W % 128 == 0 unless there is one tile.
    assert (TH * W) % 128 == 0 or nrt == 1, (TH, W)

    # ---- glue (plain JAX): channel-major, H-padded, flattened row slabs ----
    # (B, HW, Cin) -> NCHW (the module's transpose+view) -> pad H by 1 ->
    # flatten (H+2, W) -> one flat guard element each side -> overlapping
    # row slabs of (TH+2)*W + 2 flat pixels per tile.
    x_img = jnp.transpose(x, (0, 2, 1)).reshape(B, Cin, H, W)
    x_img = x_img.astype(compute_dtype)
    xp = jnp.pad(x_img, ((0, 0), (0, 0), (1, 1), (0, 0)))
    xf = jnp.pad(xp.reshape(B, Cin, (H + 2) * W), ((0, 0), (0, 0), (1, 1)))
    S = (TH + 2) * W + 2
    xs = jnp.stack(
        [xf[:, :, r * TH * W: r * TH * W + S] for r in range(nrt)], axis=1)
    # xs: (B, nrt, Cin, S)
    # TODO(synk): replace pad+stack with pl.Element-offset overlapping windows
    # (or a manual pl.ANY halo DMA) to drop this extra HBM pass.

    # Fused conv weight: (Cout, Cin, 3, 3) -> (Cout, 9*Cin), K = tap*Cin + c.
    w = jnp.transpose(conv_w, (0, 2, 3, 1)).reshape(Cout, 9 * Cin)
    w = w.astype(compute_dtype)
    # Packed per-channel params: [:,0]=conv bias, [:,1]=LN gamma, [:,2]=LN beta.
    params = jnp.stack([conv_b, gamma, beta], axis=1).astype(jnp.float32)

    vmem_limit = _step_vmem_bytes(Cin, Cout, TH, W, act_bytes)
    vmem_limit = min(max(int(1.5 * vmem_limit) + (2 << 20), 16 << 20), 64 << 20)

    out_tok = pl.pallas_call(
        functools.partial(_tune_block_kernel, width=W),
        out_shape=jax.ShapeDtypeStruct((B, Cout, H * W), jnp.float32),
        grid_spec=pltpu.PrefetchScalarGridSpec(
            num_scalar_prefetch=0,
            grid=(B, nrt),
            in_specs=[
                # NOTE: add pipeline_mode=pl.Buffered(3) here if the slab DMA
                # is still exposed at small tile sizes.
                pl.BlockSpec((1, 1, Cin, S), lambda b, r: (b, r, 0, 0)),
                pl.BlockSpec((Cout, 9 * Cin), lambda b, r: (0, 0)),
                pl.BlockSpec((Cout, 3), lambda b, r: (0, 0)),
            ],
            out_specs=pl.BlockSpec((1, Cout, TH * W), lambda b, r: (b, 0, r)),
            scratch_shapes=[pltpu.VMEM((9 * Cin, TH * W), compute_dtype)],
        ),
        compiler_params=pltpu.CompilerParams(
            dimension_semantics=("parallel", "parallel"),
            vmem_limit_bytes=vmem_limit,
        ),
    )(xs, w, params)

    # (B, Cout, H*W) -> (B, Cout, H, W): pure reshape, no transpose pass.
    # TODO(synk): emit bf16 here if the consumer of the NCHW map tolerates it.
    return out_tok.reshape(B, Cout, H, W)


def _reference(x, conv_w, conv_b, gamma, beta, resolution,
               matmul_dtype=jnp.float32):
    """Pure-JAX reference mirroring the PyTorch forward.

    matmul_dtype=bfloat16 reproduces the kernel's TPU MXU precision (f32
    accumulation); float32 is the exact module semantics.
    """
    B, HW, Cin = x.shape
    H, W = resolution
    Cout = conv_w.shape[0]
    x_img = jnp.transpose(x, (0, 2, 1)).reshape(B, Cin, H, W)
    y = jax.lax.conv_general_dilated(
        x_img.astype(matmul_dtype), conv_w.astype(matmul_dtype),
        window_strides=(1, 1), padding=((1, 1), (1, 1)),
        dimension_numbers=("NCHW", "OIHW", "NCHW"),
        preferred_element_type=jnp.float32)
    y = y + conv_b[None, :, None, None]
    y = y.reshape(B, Cout, HW).transpose(0, 2, 1)
    y = jax.nn.gelu(y, approximate=False)
    mean = y.mean(-1, keepdims=True)
    var = ((y - mean) ** 2).mean(-1, keepdims=True)
    y = (y - mean) / jnp.sqrt(var + 1e-5) * gamma + beta
    return jnp.transpose(y, (0, 2, 1)).reshape(B, Cout, H, W)


if __name__ == "__main__":
    key = jax.random.PRNGKey(0)
    B, Cin, Cout, H, W = 2, 4, 8, 16, 16
    k1, k2, k3, k4, k5 = jax.random.split(key, 5)

    # Deterministic synthetic parameters (shapes from nn.Conv2d / nn.LayerNorm).
    x = jax.random.normal(k1, (B, H * W, Cin), jnp.float32)
    conv_w = jax.random.normal(k2, (Cout, Cin, 3, 3), jnp.float32) / math.sqrt(Cin * 9)
    conv_b = 0.1 * jax.random.normal(k3, (Cout,), jnp.float32)
    gamma = 1.0 + 0.1 * jax.random.normal(k4, (Cout,), jnp.float32)
    beta = 0.1 * jax.random.normal(k5, (Cout,), jnp.float32)

    # row_tile=8 -> 2 row tiles per image (exercises the (B, nrt) grid; B*nrt
    # stays even so both megacore TensorCores get balanced work).
    out = tune_block_final(x, conv_w, conv_b, gamma, beta, (H, W), row_tile=8)
    out = jax.block_until_ready(out)
    assert out.shape == (B, Cout, H, W), out.shape

    cdt = _compute_dtype()
    is_bf16 = cdt == jnp.bfloat16

    # (a) precision-matched reference (conv operands in the kernel's compute
    #     dtype, f32 accumulation): residuals are erf-poly + summation order.
    ref_m = _reference(x, conv_w, conv_b, gamma, beta, (H, W), matmul_dtype=cdt)
    err_m = float(jnp.max(jnp.abs(out - ref_m)))
    tol_m = 1e-2 if is_bf16 else 1e-3
    assert jnp.allclose(out, ref_m, atol=tol_m, rtol=tol_m), f"max_err={err_m}"

    # (b) full-f32 module semantics; tolerance budgets the intentional bf16
    #     MXU operands on TPU plus LayerNorm amplification.
    ref_f = _reference(x, conv_w, conv_b, gamma, beta, (H, W),
                       matmul_dtype=jnp.float32)
    err_f = float(jnp.max(jnp.abs(out - ref_f)))
    tol_f = 1.5e-1 if is_bf16 else 1e-3
    assert jnp.allclose(out, ref_f, atol=tol_f, rtol=tol_f), f"max_err={err_f}"

    print("KERNEL_OK")
</pallas_src>

<mosaic_0001>
module attributes {stable_mosaic.version = 11 : i64} {
  func.func @_tune_block_kernel(%arg0: i32, %arg1: i32, %arg2: memref<1x1x4x162xf32, #tpu.memory_space<vmem>>, %arg3: memref<8x36xf32, #tpu.memory_space<vmem>>, %arg4: memref<8x3xf32, #tpu.memory_space<vmem>>, %arg5: memref<1x8x128xf32, #tpu.memory_space<vmem>>, %arg6: memref<36x128xf32, #tpu.memory_space<vmem>>) attributes {dimension_semantics = [#tpu.dimension_semantics<parallel>, #tpu.dimension_semantics<parallel>], iteration_bounds = array<i64: 2, 2>, scalar_prefetch = 0 : i64, scratch_operands = 1 : i64, tpu.core_type = #tpu.core_type<tc>, window_params = [{transform_indices = @transform_0, window_bounds = array<i64: 1, 1, 4, 162>}, {pipeline_mode = #tpu.pipeline_mode<synchronous>, transform_indices = @transform_1, window_bounds = array<i64: 8, 36>}, {pipeline_mode = #tpu.pipeline_mode<synchronous>, transform_indices = @transform_2, window_bounds = array<i64: 8, 3>}, {transform_indices = @transform_3, window_bounds = array<i64: 1, 8, 128>}]} {
    %0 = tpu.iota {dimensions = array<i32: 1>} : vector<1x128xi32>
    %c16_i32 = arith.constant 16 : i32
    %c0_i32 = arith.constant 0 : i32
    %1 = arith.cmpi eq, %c16_i32, %c0_i32 : i32
    %c1_i32 = arith.constant 1 : i32
    %2 = arith.select %1, %c1_i32, %c16_i32 : i32
    %3 = vector.broadcast %2 : i32 to vector<1x128xi32>
    %4 = arith.remsi %0, %3 : vector<1x128xi32>
    %c0_i32_0 = arith.constant 0 : i32
    %5 = vector.broadcast %c0_i32_0 : i32 to vector<1x128xi32>
    %6 = arith.cmpi ne, %4, %5 : vector<1x128xi32>
    %c0_i32_1 = arith.constant 0 : i32
    %7 = vector.broadcast %c0_i32_1 : i32 to vector<1x128xi32>
    %8 = arith.cmpi slt, %4, %7 : vector<1x128xi32>
    %c0_i32_2 = arith.constant 0 : i32
    %9 = arith.cmpi slt, %2, %c0_i32_2 : i32
    %10 = vector.broadcast %9 : i1 to vector<1x128xi1>
    %11 = vector.broadcast %10 : vector<1x128xi1> to vector<1x128xi1>
    %12 = arith.xori %8, %11 : vector<1x128xi1>
    %13 = arith.andi %12, %6 : vector<1x128xi1>
    %14 = vector.broadcast %2 : i32 to vector<1x128xi32>
    %15 = arith.addi %4, %14 : vector<1x128xi32>
    %16 = arith.select %13, %15, %4 : vector<1x128xi1>, vector<1x128xi32>
    %c0_i32_3 = arith.constant 0 : i32
    %17 = vector.broadcast %c0_i32_3 : i32 to vector<1x128xi32>
    %18 = arith.cmpi eq, %16, %17 : vector<1x128xi32>
    %c15_i32 = arith.constant 15 : i32
    %19 = vector.broadcast %c15_i32 : i32 to vector<1x128xi32>
    %20 = arith.cmpi eq, %16, %19 : vector<1x128xi32>
    %c0 = arith.constant 0 : index
    %c0_4 = arith.constant 0 : index
    %c0_5 = arith.constant 0 : index
    %c0_6 = arith.constant 0 : index
    %21 = vector.load %arg2[%c0, %c0_4, %c0_5, %c0_6] : memref<1x1x4x162xf32, #tpu.memory_space<vmem>>, vector<1x1x4x128xf32>
    %22 = vector.shape_cast %21 : vector<1x1x4x128xf32> to vector<4x128xf32>
    %cst = arith.constant 0.000000e+00 : f32
    %23 = vector.shape_cast %18 : vector<1x128xi1> to vector<1x128xi1>
    %24 = vector.broadcast %23 : vector<1x128xi1> to vector<4x128xi1>
    %25 = vector.broadcast %cst : f32 to vector<4x128xf32>
    %26 = arith.select %24, %25, %22 : vector<4x128xi1>, vector<4x128xf32>
    %c0_7 = arith.constant 0 : index
    %c0_8 = arith.constant 0 : index
    %27 = vector.load %arg6[%c0_7, %c0_8] : memref<36x128xf32, #tpu.memory_space<vmem>>, vector<4x128xf32>
    tpu.vector_store %arg6[%c0_7, %c0_8], %26 {strides = array<i32>} : memref<36x128xf32, #tpu.memory_space<vmem>>, vector<4x128xf32>,
    %c0_9 = arith.constant 0 : index
    %c0_10 = arith.constant 0 : index
    %c0_11 = arith.constant 0 : index
    %c1 = arith.constant 1 : index
    %28 = vector.load %arg2[%c0_9, %c0_10, %c0_11, %c1] : memref<1x1x4x162xf32, #tpu.memory_space<vmem>>, vector<1x1x4x128xf32>
    %29 = vector.shape_cast %28 : vector<1x1x4x128xf32> to vector<4x128xf32>
    %c4 = arith.constant 4 : index
    %c0_12 = arith.constant 0 : index
    %30 = vector.load %arg6[%c4, %c0_12] : memref<36x128xf32, #tpu.memory_space<vmem>>, vector<4x128xf32>
    tpu.vector_store %arg6[%c4, %c0_12], %29 {strides = array<i32>} : memref<36x128xf32, #tpu.memory_space<vmem>>, vector<4x128xf32>,
    %c0_13 = arith.constant 0 : index
    %c0_14 = arith.constant 0 : index
    %c0_15 = arith.constant 0 : index
    %c2 = arith.constant 2 : index
    %31 = vector.load %arg2[%c0_13, %c0_14, %c0_15, %c2] : memref<1x1x4x162xf32, #tpu.memory_space<vmem>>, vector<1x1x4x128xf32>
    %32 = vector.shape_cast %31 : vector<1x1x4x128xf32> to vector<4x128xf32>
    %cst_16 = arith.constant 0.000000e+00 : f32
    %33 = vector.shape_cast %20 : vector<1x128xi1> to vector<1x128xi1>
    %34 = vector.broadcast %33 : vector<1x128xi1> to vector<4x128xi1>
    %35 = vector.broadcast %cst_16 : f32 to vector<4x128xf32>
    %36 = arith.select %34, %35, %32 : vector<4x128xi1>, vector<4x128xf32>
    %c8 = arith.constant 8 : index
    %c0_17 = arith.constant 0 : index
    %37 = vector.load %arg6[%c8, %c0_17] : memref<36x128xf32, #tpu.memory_space<vmem>>, vector<4x128xf32>
    tpu.vector_store %arg6[%c8, %c0_17], %36 {strides = array<i32>} : memref<36x128xf32, #tpu.memory_space<vmem>>, vector<4x128xf32>,
    %c0_18 = arith.constant 0 : index
    %c0_19 = arith.constant 0 : index
    %c0_20 = arith.constant 0 : index
    %c16 = arith.constant 16 : index
    %38 = vector.load %arg2[%c0_18, %c0_19, %c0_20, %c16] : memref<1x1x4x162xf32, #tpu.memory_space<vmem>>, vector<1x1x4x128xf32>
    %39 = vector.shape_cast %38 : vector<1x1x4x128xf32> to vector<4x128xf32>
    %cst_21 = arith.constant 0.000000e+00 : f32
    %40 = vector.shape_cast %18 : vector<1x128xi1> to vector<1x128xi1>
    %41 = vector.broadcast %40 : vector<1x128xi1> to vector<4x128xi1>
    %42 = vector.broadcast %cst_21 : f32 to vector<4x128xf32>
    %43 = arith.select %41, %42, %39 : vector<4x128xi1>, vector<4x128xf32>
    %c12 = arith.constant 12 : index
    %c0_22 = arith.constant 0 : index
    %44 = vector.load %arg6[%c12, %c0_22] : memref<36x128xf32, #tpu.memory_space<vmem>>, vector<4x128xf32>
    tpu.vector_store %arg6[%c12, %c0_22], %43 {strides = array<i32>} : memref<36x128xf32, #tpu.memory_space<vmem>>, vector<4x128xf32>,
    %c0_23 = arith.constant 0 : index
    %c0_24 = arith.constant 0 : index
    %c0_25 = arith.constant 0 : index
    %c17 = arith.constant 17 : index
    %45 = vector.load %arg2[%c0_23, %c0_24, %c0_25, %c17] : memref<1x1x4x162xf32, #tpu.memory_space<vmem>>, vector<1x1x4x128xf32>
    %46 = vector.shape_cast %45 : vector<1x1x4x128xf32> to vector<4x128xf32>
    %c16_26 = arith.constant 16 : index
    %c0_27 = arith.constant 0 : index
    %47 = vector.load %arg6[%c16_26, %c0_27] : memref<36x128xf32, #tpu.memory_space<vmem>>, vector<4x128xf32>
    tpu.vector_store %arg6[%c16_26, %c0_27], %46 {strides = array<i32>} : memref<36x128xf32, #tpu.memory_space<vmem>>, vector<4x128xf32>,
    %c0_28 = arith.constant 0 : index
    %c0_29 = arith.constant 0 : index
    %c0_30 = arith.constant 0 : index
    %c18 = arith.constant 18 : index
    %48 = vector.load %arg2[%c0_28, %c0_29, %c0_30, %c18] : memref<1x1x4x162xf32, #tpu.memory_space<vmem>>, vector<1x1x4x128xf32>
    %49 = vector.shape_cast %48 : vector<1x1x4x128xf32> to vector<4x128xf32>
    %cst_31 = arith.constant 0.000000e+00 : f32
    %50 = vector.shape_cast %20 : vector<1x128xi1> to vector<1x128xi1>
    %51 = vector.broadcast %50 : vector<1x128xi1> to vector<4x128xi1>
    %52 = vector.broadcast %cst_31 : f32 to vector<4x128xf32>
    %53 = arith.select %51, %52, %49 : vector<4x128xi1>, vector<4x128xf32>
    %c20 = arith.constant 20 : index
    %c0_32 = arith.constant 0 : index
    %54 = vector.load %arg6[%c20, %c0_32] : memref<36x128xf32, #tpu.memory_space<vmem>>, vector<4x128xf32>
    tpu.vector_store %arg6[%c20, %c0_32], %53 {strides = array<i32>} : memref<36x128xf32, #tpu.memory_space<vmem>>, vector<4x128xf32>,
    %c0_33 = arith.constant 0 : index
    %c0_34 = arith.constant 0 : index
    %c0_35 = arith.constant 0 : index
    %c32 = arith.constant 32 : index
    %55 = vector.load %arg2[%c0_33, %c0_34, %c0_35, %c32] : memref<1x1x4x162xf32, #tpu.memory_space<vmem>>, vector<1x1x4x128xf32>
    %56 = vector.shape_cast %55 : vector<1x1x4x128xf32> to vector<4x128xf32>
    %cst_36 = arith.constant 0.000000e+00 : f32
    %57 = vector.shape_cast %18 : vector<1x128xi1> to vector<1x128xi1>
    %58 = vector.broadcast %57 : vector<1x128xi1> to vector<4x128xi1>
    %59 = vector.broadcast %cst_36 : f32 to vector<4x128xf32>
    %60 = arith.select %58, %59, %56 : vector<4x128xi1>, vector<4x128xf32>
    %c24 = arith.constant 24 : index
    %c0_37 = arith.constant 0 : index
    %61 = vector.load %arg6[%c24, %c0_37] : memref<36x128xf32, #tpu.memory_space<vmem>>, vector<4x128xf32>
    tpu.vector_store %arg6[%c24, %c0_37], %60 {strides = array<i32>} : memref<36x128xf32, #tpu.memory_space<vmem>>, vector<4x128xf32>,
    %c0_38 = arith.constant 0 : index
    %c0_39 = arith.constant 0 : index
    %c0_40 = arith.constant 0 : index
    %c33 = arith.constant 33 : index
    %62 = vector.load %arg2[%c0_38, %c0_39, %c0_40, %c33] : memref<1x1x4x162xf32, #tpu.memory_space<vmem>>, vector<1x1x4x128xf32>
    %63 = vector.shape_cast %62 : vector<1x1x4x128xf32> to vector<4x128xf32>
    %c28 = arith.constant 28 : index
    %c0_41 = arith.constant 0 : index
    %64 = vector.load %arg6[%c28, %c0_41] : memref<36x128xf32, #tpu.memory_space<vmem>>, vector<4x128xf32>
    tpu.vector_store %arg6[%c28, %c0_41], %63 {strides = array<i32>} : memref<36x128xf32, #tpu.memory_space<vmem>>, vector<4x128xf32>,
    %c0_42 = arith.constant 0 : index
    %c0_43 = arith.constant 0 : index
    %c0_44 = arith.constant 0 : index
    %c34 = arith.constant 34 : index
    %65 = vector.load %arg2[%c0_42, %c0_43, %c0_44, %c34] : memref<1x1x4x162xf32, #tpu.memory_space<vmem>>, vector<1x1x4x128xf32>
    %66 = vector.shape_cast %65 : vector<1x1x4x128xf32> to vector<4x128xf32>
    %cst_45 = arith.constant 0.000000e+00 : f32
    %67 = vector.shape_cast %20 : vector<1x128xi1> to vector<1x128xi1>
    %68 = vector.broadcast %67 : vector<1x128xi1> to vector<4x128xi1>
    %69 = vector.broadcast %cst_45 : f32 to vector<4x128xf32>
    %70 = arith.select %68, %69, %66 : vector<4x128xi1>, vector<4x128xf32>
    %c32_46 = arith.constant 32 : index
    %c0_47 = arith.constant 0 : index
    %71 = vector.load %arg6[%c32_46, %c0_47] : memref<36x128xf32, #tpu.memory_space<vmem>>, vector<4x128xf32>
    tpu.vector_store %arg6[%c32_46, %c0_47], %70 {strides = array<i32>} : memref<36x128xf32, #tpu.memory_space<vmem>>, vector<4x128xf32>,
    %c0_48 = arith.constant 0 : index
    %c0_49 = arith.constant 0 : index
    %72 = vector.load %arg3[%c0_48, %c0_49] : memref<8x36xf32, #tpu.memory_space<vmem>>, vector<8x36xf32>
    %c0_50 = arith.constant 0 : index
    %c0_51 = arith.constant 0 : index
    %73 = vector.load %arg6[%c0_50, %c0_51] : memref<36x128xf32, #tpu.memory_space<vmem>>, vector<36x128xf32>
    %cst_52 = arith.constant dense<0.000000e+00> : vector<8x128xf32>
    %74 = tpu.matmul %72, %73, %cst_52 {dimension_numbers = #tpu.dot_dimension_numbers<[1], [0], [0], [1], [0, 0, 1, 1], [], []>} : vector<8x36xf32>, vector<36x128xf32>, vector<8x128xf32> -> vector<8x128xf32>
    %c0_53 = arith.constant 0 : index
    %c0_54 = arith.constant 0 : index
    %75 = vector.load %arg4[%c0_53, %c0_54] : memref<8x3xf32, #tpu.memory_space<vmem>>, vector<8x1xf32>
    %76 = vector.broadcast %75 : vector<8x1xf32> to vector<8x128xf32>
    %77 = arith.addf %74, %76 : vector<8x128xf32>
    %78 = math.absf %77 : vector<8x128xf32>
    %cst_55 = arith.constant 0.707106769 : f32
    %79 = vector.broadcast %cst_55 : f32 to vector<8x128xf32>
    %80 = arith.mulf %78, %79 : vector<8x128xf32>
    %cst_56 = arith.constant 0.327591091 : f32
    %81 = vector.broadcast %cst_56 : f32 to vector<8x128xf32>
    %82 = arith.mulf %81, %80 : vector<8x128xf32>
    %cst_57 = arith.constant 1.000000e+00 : f32
    %83 = vector.broadcast %cst_57 : f32 to vector<8x128xf32>
    %84 = arith.addf %83, %82 : vector<8x128xf32>
    %cst_58 = arith.constant 1.000000e+00 : f32
    %85 = vector.broadcast %cst_58 : f32 to vector<8x128xf32>
    %86 = arith.divf %85, %84 : vector<8x128xf32>
    %cst_59 = arith.constant 1.06140542 : f32
    %87 = vector.broadcast %cst_59 : f32 to vector<8x128xf32>
    %88 = arith.mulf %86, %87 : vector<8x128xf32>
    %cst_60 = arith.constant -1.45315206 : f32
    %89 = vector.broadcast %cst_60 : f32 to vector<8x128xf32>
    %90 = arith.addf %89, %88 : vector<8x128xf32>
    %91 = arith.mulf %86, %90 : vector<8x128xf32>
    %cst_61 = arith.constant 1.42141378 : f32
    %92 = vector.broadcast %cst_61 : f32 to vector<8x128xf32>
    %93 = arith.addf %92, %91 : vector<8x128xf32>
    %94 = arith.mulf %86, %93 : vector<8x128xf32>
    %cst_62 = arith.constant -0.284496725 : f32
    %95 = vector.broadcast %cst_62 : f32 to vector<8x128xf32>
    %96 = arith.addf %95, %94 : vector<8x128xf32>
    %97 = arith.mulf %86, %96 : vector<8x128xf32>
    %cst_63 = arith.constant 0.254829586 : f32
    %98 = vector.broadcast %cst_63 : f32 to vector<8x128xf32>
    %99 = arith.addf %98, %97 : vector<8x128xf32>
    %100 = arith.mulf %86, %99 : vector<8x128xf32>
    %cst_64 = arith.constant 0.000000e+00 : f32
    %101 = vector.broadcast %cst_64 : f32 to vector<8x128xf32>
    %102 = arith.subf %101, %80 : vector<8x128xf32>
    %103 = arith.mulf %102, %80 : vector<8x128xf32>
    %104 = math.exp %103 : vector<8x128xf32>
    %105 = arith.mulf %100, %104 : vector<8x128xf32>
    %cst_65 = arith.constant 1.000000e+00 : f32
    %106 = vector.broadcast %cst_65 : f32 to vector<8x128xf32>
    %107 = arith.subf %106, %105 : vector<8x128xf32>
    %cst_66 = arith.constant 0.000000e+00 : f32
    %108 = vector.broadcast %cst_66 : f32 to vector<8x128xf32>
    %109 = arith.cmpf oge, %77, %108 : vector<8x128xf32>
    %cst_67 = arith.constant 0.000000e+00 : f32
    %110 = vector.broadcast %cst_67 : f32 to vector<8x128xf32>
    %111 = arith.subf %110, %107 : vector<8x128xf32>
    %112 = arith.select %109, %107, %111 : vector<8x128xi1>, vector<8x128xf32>
    %cst_68 = arith.constant 5.000000e-01 : f32
    %113 = vector.broadcast %cst_68 : f32 to vector<8x128xf32>
    %114 = arith.mulf %113, %77 : vector<8x128xf32>
    %cst_69 = arith.constant 1.000000e+00 : f32
    %115 = vector.broadcast %cst_69 : f32 to vector<8x128xf32>
    %116 = arith.addf %115, %112 : vector<8x128xf32>
    %117 = arith.mulf %114, %116 : vector<8x128xf32>
    %cst_70 = arith.constant dense<0.000000e+00> : vector<128xf32>
    %118 = vector.multi_reduction <add>, %117, %cst_70 [0] : vector<8x128xf32> to vector<128xf32>
    %119 = vector.shape_cast %118 : vector<128xf32> to vector<1x128xf32>
    %cst_71 = arith.constant 8.000000e+00 : f32
    %120 = vector.broadcast %cst_71 : f32 to vector<1x128xf32>
    %121 = arith.divf %119, %120 : vector<1x128xf32>
    %122 = vector.broadcast %121 : vector<1x128xf32> to vector<8x128xf32>
    %123 = arith.subf %117, %122 : vector<8x128xf32>
    %124 = arith.mulf %123, %123 : vector<8x128xf32>
    %cst_72 = arith.constant dense<0.000000e+00> : vector<128xf32>
    %125 = vector.multi_reduction <add>, %124, %cst_72 [0] : vector<8x128xf32> to vector<128xf32>
    %126 = vector.shape_cast %125 : vector<128xf32> to vector<1x128xf32>
    %cst_73 = arith.constant 8.000000e+00 : f32
    %127 = vector.broadcast %cst_73 : f32 to vector<1x128xf32>
    %128 = arith.divf %126, %127 : vector<1x128xf32>
    %cst_74 = arith.constant 9.99999974E-6 : f32
    %129 = vector.broadcast %cst_74 : f32 to vector<1x128xf32>
    %130 = arith.addf %128, %129 : vector<1x128xf32>
    %131 = math.rsqrt %130 : vector<1x128xf32>
    %132 = vector.broadcast %131 : vector<1x128xf32> to vector<8x128xf32>
    %133 = arith.mulf %123, %132 : vector<8x128xf32>
    %c0_75 = arith.constant 0 : index
    %c1_76 = arith.constant 1 : index
    %134 = vector.load %arg4[%c0_75, %c1_76] : memref<8x3xf32, #tpu.memory_space<vmem>>, vector<8x1xf32>
    %135 = vector.broadcast %134 : vector<8x1xf32> to vector<8x128xf32>
    %136 = arith.mulf %133, %135 : vector<8x128xf32>
    %c0_77 = arith.constant 0 : index
    %c2_78 = arith.constant 2 : index
    %137 = vector.load %arg4[%c0_77, %c2_78] : memref<8x3xf32, #tpu.memory_space<vmem>>, vector<8x1xf32>
    %138 = vector.broadcast %137 : vector<8x1xf32> to vector<8x128xf32>
    %139 = arith.addf %136, %138 : vector<8x128xf32>
    %c0_79 = arith.constant 0 : index
    %c0_80 = arith.constant 0 : index
    %c0_81 = arith.constant 0 : index
    %140 = vector.load %arg5[%c0_79, %c0_80, %c0_81] : memref<1x8x128xf32, #tpu.memory_space<vmem>>, vector<1x8x128xf32>
    %141 = vector.shape_cast %140 : vector<1x8x128xf32> to vector<8x128xf32>
    %142 = vector.shape_cast %139 : vector<8x128xf32> to vector<1x8x128xf32>
    tpu.vector_store %arg5[%c0_79, %c0_80, %c0_81], %142 {strides = array<i32>} : memref<1x8x128xf32, #tpu.memory_space<vmem>>, vector<1x8x128xf32>,
    return
  }
  func.func @transform_0(%arg0: i32, %arg1: i32) -> (i32, i32, i32, i32) {
    %c0_i32 = arith.constant 0 : i32
    %c0_i32_0 = arith.constant 0 : i32
    %c0_i32_1 = arith.constant 0 : i32
    return %arg0, %arg1, %c0_i32, %c0_i32_0 : i32, i32, i32, i32
  }
  func.func @transform_1(%arg0: i32, %arg1: i32) -> (i32, i32) {
    %c0_i32 = arith.constant 0 : i32
    %c0_i32_0 = arith.constant 0 : i32
    %c0_i32_1 = arith.constant 0 : i32
    return %c0_i32, %c0_i32_0 : i32, i32
  }
  func.func @transform_2(%arg0: i32, %arg1: i32) -> (i32, i32) {
    %c0_i32 = arith.constant 0 : i32
    %c0_i32_0 = arith.constant 0 : i32
    %c0_i32_1 = arith.constant 0 : i32
    return %c0_i32, %c0_i32_0 : i32, i32
  }
  func.func @transform_3(%arg0: i32, %arg1: i32) -> (i32, i32, i32) {
    %c0_i32 = arith.constant 0 : i32
    %c0_i32_0 = arith.constant 0 : i32
    return %arg0, %c0_i32, %arg1 : i32, i32, i32
  }
}

</mosaic_0001>

<llo_original>
// kernel: tpu_custom_call.1
$region0: #{tpu_custom_call.1}
  #allocation0 [shape = 'u32[]', space=smem, size = 0x4, offset = 0x4, fixed_abs, tag = 'smem constant byte address 0x4 - core index']
  #allocation1 [shape = 'u32[144,128]{1,0:T(1,128)}', space=vmem, size = 0x12000, scoped, tag = 'internal scratch']
  #allocation2 [shape = 'f32[36,128]{1,0:T(8,128)}', space=vmem, size = 0x5000, scoped, tag = 'scratch operand']
  %s0 = inlined_call_operand.hbm [shape: f32[2,2,4,162], index: 0, kind: input, shape index: {}]
  %s1 = inlined_call_operand.vmem [shape: f32[8,36], index: 1, kind: input, shape index: {}]
  %s2 = inlined_call_operand.vmem [shape: f32[8,3], index: 2, kind: input, shape index: {}]
  %s3 = inlined_call_operand.hbm [shape: f32[2,8,256], index: 3, kind: output, shape index: {}]
  %s4 = sld [smem:[#allocation0]]
  $region49: #{tpu_custom_call.1} parent=0
    _
  %s6 = ssub.s32 1, %s4
  %s7 = scalar_select 0, %s6, %s4
  $region1: #{tpu_custom_call.1} parent=0
    #allocation3 [shape = 'u8[8192]{0}', space=vmem, size = 0x2000, scoped, tag = 'input window, operand 0']
    #allocation4 [shape = 's32[2]{0}', space=sflag, size = 0x8, scoped, tag = 'scoped memory for tpu_custom_call.1']
    #allocation5 [shape = 's32[2]{0}', space=sflag, size = 0x8, scoped, tag = 'scoped memory for tpu_custom_call.1']
    #allocation6 [shape = 'u8[8192]{0}', space=vmem, size = 0x2000, scoped, tag = 'output window, operand 0']
    %8 = vsyncpa [#allocation4], 0
    %s9 = scalar_lea.sflag [#allocation4], 1
    %10 = vsyncpa %s9, 0
    %11 = vsyncpa [#allocation5], 0
    %s12 = scalar_lea.sflag [#allocation5], 1
    %13 = vsyncpa %s12, 0
    loop: start=0, step=1, limit=6
    $region2: #{tpu_custom_call.1} parent=1 // loop_pre_header
      _
    $region3: #{tpu_custom_call.1} parent=1 // loop_header
      %s15 = sphi 0, %s19
      %p16 = scmp.ge.s32.totalorder %s15, 6
      %s22 = sphi 0, %s34
      %s23 = sphi 0, %s30
      %s24 = sphi 0, %s22
      %s25 = sphi 0, %s23
      %s26 = sphi 0, %s24
      %s27 = sphi 0, %s25
      %s39 = sphi 0, %s41
      %s42 = sphi 0, %s39
      %s43 = sphi 0, %s42
      %s59 = sphi 0, %s43
      %s63 = sphi 0, %s63
      %s65 = sphi 0, %s63
      %s66 = sphi 0, %s65
      %s80 = sphi 0, %s66
      %s84 = sphi 0, %s84
      %s86 = sphi 0, %s84
      %s87 = sphi 0, %s86
      %s101 = sphi 0, %s87
      %s109 = sphi 0, %s111
      %s112 = sphi 0, %s109
      %s113 = sphi 0, %s112
      %s129 = sphi 0, %s113
    $region4: #{tpu_custom_call.1} parent=1 // loop_header_branch
      %18 = sbr.rel (%p16) target = $region8
    $region5: #{tpu_custom_call.1} parent=1 // loop_body
      %s20 = ssub.s32 %s15, 1
      %s21 = ssub.s32 %s15, 2
      %s28 = sadd.s32 1, %s23
      %p29 = scmp.ge.s32.totalorder %s28, 2
      %s30 = scalar_select %p29, 0, %s28
      %s31 = sadd.s32 1, %s22
      %s32 = scalar_select %p29, %s31, %s22
      %p33 = scmp.ge.s32.totalorder %s32, 2
      %s34 = scalar_select %p33, 0, %s32
      %s35 = ssub.s32 %s22, %s34
      %s36 = ssub.s32 %s23, %s30
      %s37 = sor.u32 %s35, %s36
      %p38 = scmp.eq.s32.totalorder %s37, 0
      %s40 = sadd.s32 %s39, 1
      %s41 = scalar_select %p38, %s39, %s40
      %p44 = pneg %p38
      %p45 = scmp.eq.s32.totalorder %s15, 3
      %p46 = por %p44, %p45
      %p47 = scmp.ne.s32.totalorder %s39, %s42
      %p48 = scmp.eq.s32.totalorder %s15, 0
      %p49 = por %p47, %p48
      %p50 = scmp.ne.s32.totalorder %s39, %s42
      %p51 = scmp.eq.s32.totalorder %s20, 3
      %p52 = por %p50, %p51
      %p53 = scmp.ne.s32.totalorder %s42, %s43
      %p54 = scmp.eq.s32.totalorder %s20, 0
      %p55 = por %p53, %p54
      %p56 = scmp.ne.s32.totalorder %s42, %s43
      %p57 = scmp.eq.s32.totalorder %s21, 3
      %p58 = por %p56, %p57
      %p60 = scmp.ne.s32.totalorder %s43, %s59
      %p61 = scmp.eq.s32.totalorder %s21, 0
      %p62 = por %p60, %p61
      %s64 = sadd.s32 %s63, 1
      %p67 = scmp.eq.s32.totalorder %s15, 3
      %p68 = scmp.ne.s32.totalorder %s63, %s65
      %p69 = scmp.eq.s32.totalorder %s15, 0
      %p70 = por %p68, %p69
      %p71 = scmp.ne.s32.totalorder %s63, %s65
      %p72 = scmp.eq.s32.totalorder %s20, 3
      %p73 = por %p71, %p72
      %p74 = scmp.ne.s32.totalorder %s65, %s66
      %p75 = scmp.eq.s32.totalorder %s20, 0
      %p76 = por %p74, %p75
      %p77 = scmp.ne.s32.totalorder %s65, %s66
      %p78 = scmp.eq.s32.totalorder %s21, 3
      %p79 = por %p77, %p78
      %p81 = scmp.ne.s32.totalorder %s66, %s80
      %p82 = scmp.eq.s32.totalorder %s21, 0
      %p83 = por %p81, %p82
      %s85 = sadd.s32 %s84, 1
      %p88 = scmp.eq.s32.totalorder %s15, 3
      %p89 = scmp.ne.s32.totalorder %s84, %s86
      %p90 = scmp.eq.s32.totalorder %s15, 0
      %p91 = por %p89, %p90
      %p92 = scmp.ne.s32.totalorder %s84, %s86
      %p93 = scmp.eq.s32.totalorder %s20, 3
      %p94 = por %p92, %p93
      %p95 = scmp.ne.s32.totalorder %s86, %s87
      %p96 = scmp.eq.s32.totalorder %s20, 0
      %p97 = por %p95, %p96
      %p98 = scmp.ne.s32.totalorder %s86, %s87
      %p99 = scmp.eq.s32.totalorder %s21, 3
      %p100 = por %p98, %p99
      %p102 = scmp.ne.s32.totalorder %s87, %s101
      %p103 = scmp.eq.s32.totalorder %s21, 0
      %p104 = por %p102, %p103
      %s105 = ssub.s32 %s22, %s34
      %s106 = ssub.s32 %s23, %s30
      %s107 = sor.u32 %s105, %s106
      %p108 = scmp.eq.s32.totalorder %s107, 0
      %s110 = sadd.s32 %s109, 1
      %s111 = scalar_select %p108, %s109, %s110
      %p114 = pneg %p108
      %p115 = scmp.eq.s32.totalorder %s15, 3
      %p116 = por %p114, %p115
      %p117 = scmp.ne.s32.totalorder %s109, %s112
      %p118 = scmp.eq.s32.totalorder %s15, 0
      %p119 = por %p117, %p118
      %p120 = scmp.ne.s32.totalorder %s109, %s112
      %p121 = scmp.eq.s32.totalorder %s20, 3
      %p122 = por %p120, %p121
      %p123 = scmp.ne.s32.totalorder %s112, %s113
      %p124 = scmp.eq.s32.totalorder %s20, 0
      %p125 = por %p123, %p124
      %p126 = scmp.ne.s32.totalorder %s112, %s113
      %p127 = scmp.eq.s32.totalorder %s21, 3
      %p128 = por %p126, %p127
      %p130 = scmp.ne.s32.totalorder %s113, %s129
      %p131 = scmp.eq.s32.totalorder %s21, 0
      %p132 = por %p130, %p131
      %p133 = scmp.le.s32.totalorder 1, %s15
      %p134 = scmp.lt.s32.totalorder %s15, 5
      %p135 = pnand %p133, %p134
      %p136 = pneg %p135
      // Predicated region
      $region9: #{tpu_custom_call.1} parent=5 // pred_check
        _
      $region10: #{tpu_custom_call.1} parent=5 // pred_check_branch
        %138 = sbr.rel (%p135) target = $region12
      $region11: #{tpu_custom_call.1} parent=5 // pred_region
        %s139 = ssub.s32 %s15, 1
        // Predicated region
        $region13: #{tpu_custom_call.1} parent=11 // pred_check
          %p140 = pneg %p76
        $region14: #{tpu_custom_call.1} parent=11 // pred_check_branch
          %142 = sbr.rel (%p140) target = $region16
        $region15: #{tpu_custom_call.1} parent=11 // pred_region
          _
        $region16: #{tpu_custom_call.1} parent=11 // pred_fallthru
          _
        // Predicated region
        $region17: #{tpu_custom_call.1} parent=11 // pred_check
          %p143 = pneg %p97
        $region18: #{tpu_custom_call.1} parent=11 // pred_check_branch
          %145 = sbr.rel (%p143) target = $region20
        $region19: #{tpu_custom_call.1} parent=11 // pred_region
          _
        $region20: #{tpu_custom_call.1} parent=11 // pred_fallthru
          _
      $region12: #{tpu_custom_call.1} parent=5 // pred_fallthru
        _
      %p146 = scmp.lt.s32.totalorder %s15, 4
      // Predicated region
      $region21: #{tpu_custom_call.1} parent=5 // pred_check
        %p147 = pneg %p146
      $region22: #{tpu_custom_call.1} parent=5 // pred_check_branch
        %149 = sbr.rel (%p147) target = $region24
      $region23: #{tpu_custom_call.1} parent=5 // pred_region
        // Predicated region
        $region25: #{tpu_custom_call.1} parent=23 // pred_check
          %p150 = pneg %p49
        $region26: #{tpu_custom_call.1} parent=23 // pred_check_branch
          %152 = sbr.rel (%p150) target = $region28
        $region27: #{tpu_custom_call.1} parent=23 // pred_region
          %s153 = sand.u32 %s39, 1
          %s154 = scalar_lea.sflag [#allocation4], %s153
          %s155 = sand.u32 %s39, 1
          %s156 = smul.addr %s155, 8
          %s157 = scalar_lea.vmem [#allocation3], %s156
          %s159 = ssub.s32 128, 128
          %160 = vsyncadd %s154, %s159
          %s161 = smul.addr %s23, 2
          %s162 = smul.addr %s22, 4
          %s163 = sadd.s32 %s161, %s162
          %s164 = smul.addr %s163, 64
          %s165 = scalar_lea.hbm %s0, %s164
          %s167 = sshll.u32 %s157, 4
          %s168 = int_to_ptr.vmem [resolvable:$true] %s167
          %170 = dma.hbm_to_vmem [thread:$0]  %s165, 128, %s168, %s154
        $region28: #{tpu_custom_call.1} parent=23 // pred_fallthru
          _
      $region24: #{tpu_custom_call.1} parent=5 // pred_fallthru
        _
      %p171 = scmp.le.s32.totalorder 1, %s15
      %p172 = scmp.lt.s32.totalorder %s15, 5
      %p173 = pnand %p171, %p172
      %p174 = pneg %p173
      // Predicated region
      $region29: #{tpu_custom_call.1} parent=5 // pred_check
        _
      $region30: #{tpu_custom_call.1} parent=5 // pred_check_branch
        %176 = sbr.rel (%p173) target = $region32
      $region31: #{tpu_custom_call.1} parent=5 // pred_region
        %s177 = ssub.s32 %s15, 1
        %s178 = sand.u32 %s42, 1
        %s179 = scalar_lea.sflag [#allocation4], %s178
        %s180 = sand.u32 %s42, 1
        %s181 = smul.addr %s180, 8
        %s182 = scalar_lea.vmem [#allocation3], %s181
        // Predicated region
        $region33: #{tpu_custom_call.1} parent=31 // pred_check
          %p183 = pneg %p55
        $region34: #{tpu_custom_call.1} parent=31 // pred_check_branch
          %185 = sbr.rel (%p183) target = $region36
        $region35: #{tpu_custom_call.1} parent=31 // pred_region
          %186 = dma.done %s179, 128
        $region36: #{tpu_custom_call.1} parent=31 // pred_fallthru
          _
        %s187 = sand.u32 %s42, 1
        %s188 = scalar_lea.sflag [#allocation4], %s187
        %s189 = sand.u32 %s42, 1
        %s190 = smul.addr %s189, 8
        %s191 = scalar_lea.vmem [#allocation3], %s190
        %p192 = pneg %p55
        %p193 = pneg %p52
        %p194 = pneg %p76
        %p195 = pneg %p73
        %p196 = pneg %p97
        %p197 = pneg %p94
        %p198 = pneg %p125
        %p199 = pneg %p122
        %s200 = sand.u32 %s112, 1
        %s201 = scalar_lea.sflag [#allocation5], %s200
        %s202 = sand.u32 %s112, 1
        %s203 = smul.addr %s202, 8
        %s204 = scalar_lea.vmem [#allocation6], %s203
        %v205 = vlaneseq
        %v206 = vand.u32 %v205, 127
        %vm207 = vcmp.lt.s32.totalorder %v206, 0
        %v208 = vsub.s32 0, %v206
        %v209 = vsel %vm207, %v208, %v206
        %v210 = vshrl.u32 %v209, 4
        %v211 = vand.u32 %v209, 15
        %v212 = vsub.s32 0, %v211
        %v213 = vsel %vm207, %v212, %v211
        %vm214 = vcmp.ne.s32.totalorder %v213, 0
        %vm215 = vcmp.lt.s32.totalorder %v213, 0
        %vm216 = vmand %vm215, %vm214
        %v217 = vadd.s32 %v213, 16
        %v218 = vsel %vm216, %v217, %v213
        %vm219 = vcmp.eq.s32.totalorder %v218, 0
        %vm220 = vcmp.eq.s32.totalorder %v218, 15
        %v221 = vld [vmem:[%s182] sm:$0xf]
        %v222 = vsel %vm219, 1, 0
        %vm223 = vcmp.eq.s32.totalorder %v222, 1
        %v224 = vsel %vm223, 0.0, %v221
        %225 = vst [vmem:[#allocation2] sm:$0xf] %v224
        %v226 = vld [vmem:[%s182] sm:$0xff]
        %v228 = vcombine.high %v226, %v226
        %229 = vrot.lane.b32.xlu0 %v226, 127
        %v230 = vpop.permute.xlu0 %229
        %231 = vrot.lane.b32.xlu0 %v228, 127
        %v232 = vpop.permute.xlu0 %231
        %vm233 = vcmask 1039360
        %v234 = vsel %vm233, %v230, %v232
        %236 = vst [vmem:[#allocation2 + $0x4] sm:$0xf] %v234
        %v237 = vld [vmem:[%s182] sm:$0xff]
        %v238 = vsel %vm220, 1, 0
        %vm239 = vcmp.eq.s32.totalorder %v238, 1
        %v241 = vcombine.high %v237, %v237
        %242 = vrot.lane.b32.xlu0 %v237, 126
        %v243 = vpop.permute.xlu0 %242
        %244 = vrot.lane.b32.xlu0 %v241, 126
        %v245 = vpop.permute.xlu0 %244
        %vm246 = vcmask 1031168
        %v247 = vsel %vm246, %v243, %v245
        %v249 = vsel %vm239, 0.0, %v247
        %250 = vst [vmem:[#allocation2 + $0x8] sm:$0xf] %v249
        %v251 = vld [vmem:[%s182] sm:$0xff]
        %v253 = vcombine.high %v251, %v251
        %254 = vrot.lane.b32.xlu0 %v251, 112
        %v255 = vpop.permute.xlu0 %254
        %256 = vrot.lane.b32.xlu0 %v253, 112
        %v257 = vpop.permute.xlu0 %256
        %vm258 = vcmask 916480
        %v259 = vsel %vm258, %v255, %v257
        %v261 = vsel %vm223, 0.0, %v259
        %262 = vst [vmem:[#allocation2 + $0xc] sm:$0xf] %v261
        %v263 = vld [vmem:[%s182] sm:$0xff]
        %v265 = vcombine.high %v263, %v263
        %266 = vrot.lane.b32.xlu0 %v263, 111
        %v267 = vpop.permute.xlu0 %266
        %268 = vrot.lane.b32.xlu0 %v265, 111
        %v269 = vpop.permute.xlu0 %268
        %vm270 = vcmask 908288
        %v271 = vsel %vm270, %v267, %v269
        %273 = vst [vmem:[#allocation2 + $0x10] sm:$0xf] %v271
        %v274 = vld [vmem:[%s182] sm:$0xff]
        %v276 = vcombine.high %v274, %v274
        %277 = vrot.lane.b32.xlu0 %v274, 110
        %v278 = vpop.permute.xlu0 %277
        %279 = vrot.lane.b32.xlu0 %v276, 110
        %v280 = vpop.permute.xlu0 %279
        %vm281 = vcmask 900096
        %v282 = vsel %vm281, %v278, %v280
        %v284 = vsel %vm239, 0.0, %v282
        %285 = vst [vmem:[#allocation2 + $0x14] sm:$0xf] %v284
        %v286 = vld [vmem:[%s182] sm:$0xff]
        %v288 = vcombine.high %v286, %v286
        %289 = vrot.lane.b32.xlu0 %v286, 96
        %v290 = vpop.permute.xlu0 %289
        %291 = vrot.lane.b32.xlu0 %v288, 96
        %v292 = vpop.permute.xlu0 %291
        %vm293 = vcmask 785408
        %v294 = vsel %vm293, %v290, %v292
        %v296 = vsel %vm223, 0.0, %v294
        %297 = vst [vmem:[#allocation2 + $0x18] sm:$0xf] %v296
        %v298 = vld [vmem:[%s182] sm:$0xff]
        %v300 = vcombine.high %v298, %v298
        %301 = vrot.lane.b32.xlu0 %v298, 95
        %v302 = vpop.permute.xlu0 %301
        %303 = vrot.lane.b32.xlu0 %v300, 95
        %v304 = vpop.permute.xlu0 %303
        %vm305 = vcmask 777216
        %v306 = vsel %vm305, %v302, %v304
        %308 = vst [vmem:[#allocation2 + $0x1c] sm:$0xf] %v306
        %v309 = vld [vmem:[%s182] sm:$0xff]
        %v311 = vcombine.high %v309, %v309
        %312 = vrot.lane.b32.xlu0 %v309, 94
        %v313 = vpop.permute.xlu0 %312
        %314 = vrot.lane.b32.xlu0 %v311, 94
        %v315 = vpop.permute.xlu0 %314
        %vm316 = vcmask 769024
        %v317 = vsel %vm316, %v313, %v315
        %v319 = vsel %vm239, 0.0, %v317
        %320 = vst [vmem:[#allocation2 + $0x20] sm:$0xf] %v319
        %v321 = vld [vmem:[%s1] sm:$0xff]
        %v322 = vld [vmem:[#allocation2] sm:$0xff]
        %v323 = vld [vmem:[#allocation2 + $0x8] sm:$0xff]
        %v324 = vld [vmem:[#allocation2 + $0x10] sm:$0xff]
        %v325 = vld [vmem:[#allocation2 + $0x18] sm:$0xff]
        %v326 = vld [vmem:[#allocation2 + $0x20] sm:$0xf]
        %v327 = vld [vmem:[%s2] sm:$0xff]
        %329 = vset.pattern.permute.xlu0 0
        %330 = vperm.xlu0 %329, %v327
        %v331 = vpop.permute.xlu0 %330
        %vm333 = vcmask 293888
        %v335 = vsel %vm333, %v321, 0
        %vm337 = vcmask 1043456
        %v339 = vsel %vm337, %v326, 0
        %341 = vmatprep.subr.mxu0 0.0
        %342 = vmatpush1.msra.mxu0 %v322
        %343 = vmatprep.subr.mxu0 0.0
        %344 = vmatpush1.msra.mxu0 %v323
        %345 = vmatprep.subr.mxu0 0.0
        %346 = vmatpush1.msra.mxu0 %v324
        %347 = vmatprep.subr.mxu0 0.0
        %348 = vmatpush1.msra.mxu0 %v325
        %349 = vmatprep.subr.mxu0 0.0
        %350 = vmatpush1.msra.mxu0 %v339
        %351 = vmatprep.subr.mxu0 0.0
        %352 = vmatpush1.msra.mxu0 0.0
        %353 = vmatprep.subr.mxu0 0.0
        %354 = vmatpush1.msra.mxu0 0.0
        %355 = vmatprep.subr.mxu0 0.0
        %356 = vmatpush1.msra.mxu0 0.0
        %357 = vmatprep.subr.mxu0 0.0
        %358 = vmatpush1.msra.mxu0 0.0
        %359 = vmatprep.subr.mxu0 0.0
        %360 = vmatpush1.msra.mxu0 0.0
        %361 = vmatprep.subr.mxu0 0.0
        %362 = vmatpush1.msra.mxu0 0.0
        %363 = vmatprep.subr.mxu0 0.0
        %364 = vmatpush1.msra.mxu0 0.0
        %365 = vmatprep.subr.mxu0 0.0
        %366 = vmatpush1.msra.mxu0 0.0
        %367 = vmatprep.subr.mxu0 0.0
        %368 = vmatpush1.msra.mxu0 0.0
        %369 = vmatprep.subr.mxu0 0.0
        %370 = vmatpush1.msra.mxu0 0.0
        %371 = vmatprep.subr.mxu0 0.0
        %372 = vmatpush1.msra.mxu0 0.0
        %373 = vmatprep.subr.mxu0 0.0
        %374 = vmatpush1.msra.mxu0 0.0
        %375 = vmatprep.subr.mxu0 0.0
        %376 = vmatpush1.msra.mxu0 0.0
        %377 = vmatprep.subr.mxu0 0.0
        %378 = vmatpush1.msra.mxu0 0.0
        %379 = vmatprep.subr.mxu0 0.0
        %380 = vmatpush1.msra.mxu0 0.0
        %381 = vmatprep.subr.mxu0 0.0
        %382 = vmatpush1.msra.mxu0 0.0
        %383 = vmatprep.subr.mxu0 0.0
        %384 = vmatpush1.msra.mxu0 0.0
        %385 = vmatprep.subr.mxu0 0.0
        %386 = vmatpush1.msra.mxu0 0.0
        %387 = vmatprep.subr.mxu0 0.0
        %388 = vmatpush1.msra.mxu0 0.0
        %389 = vmatprep.subr.mxu0 0.0
        %390 = vmatpush1.msra.mxu0 0.0
        %391 = vmatprep.subr.mxu0 0.0
        %392 = vmatpush1.msra.mxu0 0.0
        %393 = vmatprep.subr.mxu0 0.0
        %394 = vmatpush1.msra.mxu0 0.0
        %395 = vmatprep.subr.mxu0 0.0
        %396 = vmatpush1.msra.mxu0 0.0
        %397 = vmatprep.subr.mxu0 0.0
        %398 = vmatpush1.msra.mxu0 0.0
        %399 = vmatprep.subr.mxu0 0.0
        %400 = vmatpush1.msra.mxu0 0.0
        %401 = vmatprep.subr.mxu0 0.0
        %402 = vmatpush1.msra.mxu0 0.0
        %403 = vmatprep.subr.mxu0 0.0
        %404 = vmatpush1.msra.mxu0 0.0
        %405 = vmatprep.mubr.f32.mxu0 0.0
        %406 = vmatmul.mubr.f32.gmra.mrb[0].mxu0 %v335
        %v407 = vpop.f32.mrb[0].mxu0
        %v408 = vadd.f32 %v331, %v407
        %v409 = vpop.f32.mrb[0].mxu0
        %410 = vdwg.mxu0
        %v411 = vand.u32 2147483647, %v408
        %v412 = vmul.f32 %v411, 0.70710677
        %v413 = vmul.f32 %v412, 0.3275911
        %v414 = vadd.f32 %v413, 1.0
        %v415 = vrcp.pop %v414
        %v416 = vmul.f32 1.0, %v415
        %v417 = vmul.f32 %v416, 1.0614054
        %v418 = vadd.f32 %v417, -1.4531521
        %v419 = vmul.f32 %v416, %v418
        %v420 = vadd.f32 %v419, 1.4214138
        %v421 = vmul.f32 %v416, %v420
        %v422 = vadd.f32 %v421, -0.28449672
        %v423 = vmul.f32 %v416, %v422
        %v424 = vadd.f32 %v423, 0.2548296
        %v425 = vmul.f32 %v416, %v424
        %v426 = vsub.f32 0.0, %v412
        %v427 = vmul.f32 %v426, %v412
        %v428 = vmul.f32 %v427, 1.442695
        %v429 = vpow.pop %v428
        %v430 = vmul.f32 %v425, %v429
        %v431 = vsub.f32 1.0, %v430
        %vm432 = vcmp.ge.f32.partialorder %v408, 0.0
        %v433 = vsub.f32 0.0, %v431
        %v434 = vsel %vm432, %v431, %v433
        %v435 = vmul.f32 %v408, 0.5
        %v436 = vadd.f32 %v434, 1.0
        %v437 = vmul.f32 %v435, %v436
        %v438 = vrot.slane %v437, 4
        %v439 = vadd.f32 %v437, %v438
        %v440 = vrot.slane %v439, 2
        %v441 = vadd.f32 %v439, %v440
        %v442 = vrot.slane %v441, 1
        %v443 = vadd.f32 %v441, %v442
        %v444 = vrcp.pop 8.0
        %v445 = vmul.f32 %v443, %v444
        %v446 = vsub.f32 %v437, %v445
        %v447 = vmul.f32 %v446, %v446
        %v448 = vrot.slane %v447, 4
        %v449 = vadd.f32 %v447, %v448
        %v450 = vrot.slane %v449, 2
        %v451 = vadd.f32 %v449, %v450
        %v452 = vrot.slane %v451, 1
        %v453 = vadd.f32 %v451, %v452
        %v454 = vmul.f32 %v453, %v444
        %v455 = vadd.f32 %v454, 1e-05
        %v456 = vrsqrt.pop %v455
        %v457 = vmul.f32 %v446, %v456
        %458 = vset.pattern.permute.xlu0 1
        %459 = vperm.xlu0 %458, %v327
        %v460 = vpop.permute.xlu0 %459
        %v462 = vmul.f32 %v457, %v460
        %463 = vset.pattern.permute.xlu0 2
        %464 = vperm.xlu0 %463, %v327
        %v465 = vpop.permute.xlu0 %464
        %v467 = vadd.f32 %v462, %v465
        %468 = vst [vmem:[%s204] sm:$0xff] %v467
        %s469 = sand.u32 %s112, 1
        %s470 = scalar_lea.sflag [#allocation5], %s469
        %s471 = sand.u32 %s112, 1
        %s472 = smul.addr %s471, 8
        %s473 = scalar_lea.vmem [#allocation6], %s472
        // Predicated region
        $region37: #{tpu_custom_call.1} parent=31 // pred_check
          %p474 = pneg %p122
        $region38: #{tpu_custom_call.1} parent=31 // pred_check_branch
          %476 = sbr.rel (%p474) target = $region40
        $region39: #{tpu_custom_call.1} parent=31 // pred_region
          %s478 = ssub.s32 128, 128
          %479 = vsyncadd %s470, %s478
          %s480 = smul.addr %s24, 2
          %s481 = sadd.s32 %s25, %s480
          %s482 = smul.addr %s481, 128
          %s483 = scalar_lea.hbm %s3, %s482
          %s485 = sshll.u32 %s473, 4
          %s486 = int_to_ptr.vmem [resolvable:$true] %s485
          %488 = dma.vmem_to_hbm [thread:$0]  %s486, 128, %s483, %s470
        $region40: #{tpu_custom_call.1} parent=31 // pred_fallthru
          _
      $region32: #{tpu_custom_call.1} parent=5 // pred_fallthru
        _
      %p489 = scmp.le.s32.totalorder 2, %s15
      // Predicated region
      $region41: #{tpu_custom_call.1} parent=5 // pred_check
        %p490 = pneg %p489
      $region42: #{tpu_custom_call.1} parent=5 // pred_check_branch
        %492 = sbr.rel (%p490) target = $region44
      $region43: #{tpu_custom_call.1} parent=5 // pred_region
        %s493 = ssub.s32 %s15, 2
        // Predicated region
        $region45: #{tpu_custom_call.1} parent=43 // pred_check
          %p494 = pneg %p128
        $region46: #{tpu_custom_call.1} parent=43 // pred_check_branch
          %496 = sbr.rel (%p494) target = $region48
        $region47: #{tpu_custom_call.1} parent=43 // pred_region
          %s497 = sand.u32 %s113, 1
          %s498 = scalar_lea.sflag [#allocation5], %s497
          %s499 = sand.u32 %s113, 1
          %s500 = smul.addr %s499, 8
          %s501 = scalar_lea.vmem [#allocation6], %s500
          %502 = dma.done %s498, 128
        $region48: #{tpu_custom_call.1} parent=43 // pred_fallthru
          _
      $region44: #{tpu_custom_call.1} parent=5 // pred_fallthru
        _
    $region6: #{tpu_custom_call.1} parent=1 // loop_footer
      %s19 = sadd.s32 1, %s15
    $region7: #{tpu_custom_call.1} parent=1 // loop_footer_branch
      %14 = sbr.rel target = $region3
    $region8: #{tpu_custom_call.1} parent=1 // loop_exit
      _
    %503 = vsyncpa [#allocation4], 1
    %s504 = scalar_lea.sflag [#allocation4], 1
    %505 = vsyncpa %s504, 1
    %506 = vsyncpa [#allocation5], 1
    %s507 = scalar_lea.sflag [#allocation5], 1
    %508 = vsyncpa %s507, 1

</llo_original>
